<compile_context>
chip_gen: v7x
topology: tpu7x:2x2x1
jax: 0.10.0
libtpu: 0.0.40
codegen_flags: <defaults>
</compile_context>

<pallas_src>
import jax
import jax.numpy as jnp
from jax import lax
from jax.experimental import pallas as pl
from jax.experimental.pallas import tpu as pltpu


def _make_predictor_kernel(bn, cout, unroll):
    """Kernel over one batch-tile of `bn` images (whole H*W per image)."""

    def kernel(x_ref, wt_ref, b_ref, wl_ref, bl_ref, yt_ref, lt_ref):
        w = wt_ref[...]        # (4*Cout, Cin)  bf16, resident across the grid
        b = b_ref[...]         # (4*Cout, 1)    f32
        wl = wl_ref[...]       # (Cout, 1)      f32
        bl = bl_ref[...]       # (1, 1)         f32

        def body(bi, carry):
            # Native-layout f32 load, bf16 cast on the VPU (free: HBM-bound).
            xb = x_ref[bi].astype(w.dtype)                       # (Cin, HW)
            # Deconv-as-matmul, all 4 taps packed on the channel axis (MXU,
            # bf16 x bf16 inputs, f32 accumulation).
            y = jnp.dot(w, xb, preferred_element_type=jnp.float32)  # (4*Cout, HW)
            y = jnp.maximum(y + b, 0.0)                          # bias + ReLU, f32
            # Dominant HBM stream: store the mask feature in bf16.
            yt_ref[bi] = y.astype(yt_ref.dtype)
            # 1x1 logits conv: block-diagonal weight -> VPU multiply + sublane
            # reduce on the f32 accumulator (keeps the MXU out of it).
            y4 = y.reshape(4, cout, y.shape[-1])                 # (4, Cout, HW)
            l4 = jnp.sum(y4 * wl, axis=1) + bl                   # (4, HW) f32
            # Pad to 8 sublanes so the store is full-vreg / unmasked.
            lt_ref[bi] = jnp.concatenate([l4, jnp.zeros_like(l4)], axis=0)
            return carry

        lax.fori_loop(0, bn, body, 0, unroll=unroll)

    return kernel


def seq_maskrcnn_c4_predictor(x, w_deconv, b_deconv, w_logit, b_logit, *,
                              compute_dtype=jnp.bfloat16,
                              feature_store_dtype=jnp.bfloat16,
                              target_step_bytes=4 * 1024 * 1024,
                              max_images_per_step=32):
    """x: (N, Cin, H, W) NCHW float32.
    w_deconv: (Cin, Cout, 2, 2) PyTorch ConvTranspose2d layout.
    b_deconv: (Cout,)
    w_logit:  (1, Cout, 1, 1) PyTorch Conv2d layout.
    b_logit:  (1,)
    Returns (mask_feature (N, Cout, 2H, 2W) f32, mask_logits (N, 1, 2H, 2W) f32).
    """
    N, Cin, H, W = x.shape
    Cout = int(w_deconv.shape[1])
    HW = H * W
    if int(w_logit.shape[0]) != 1:
        raise NotImplementedError("SeqMaskRCNNC4Predictor is defined with num_classes=1")

    # ---- parameter packing (tiny, one-off) ----
    # WpackT row = (di*2 + dj)*Cout + co, column = cin.
    WpackT = (jnp.transpose(w_deconv, (2, 3, 1, 0))
                 .reshape(4 * Cout, Cin).astype(compute_dtype))
    bpack = jnp.tile(b_deconv.astype(jnp.float32), 4).reshape(4 * Cout, 1)
    wl = w_logit.reshape(Cout, 1).astype(jnp.float32)
    bl = b_logit.reshape(1, 1).astype(jnp.float32)

    # NCHW -> (N, Cin, H*W): a free reshape; no transpose, no pre-cast pass.
    x3 = x.reshape(N, Cin, HW)

    # ---- images-per-step bn: largest value that (a) fits the per-generation
    # VMEM budget, (b) reaches ~target_step_bytes HBM traffic per grid step,
    # (c) keeps >= 4 grid steps when N allows (>= 2 per TensorCore). ----
    try:
        vmem_cap = int(pltpu.get_tpu_info().vmem_capacity_bytes) or (64 << 20)
    except Exception:
        vmem_cap = 64 << 20
    vmem_budget = min(vmem_cap // 2, 64 << 20)

    in_isz = jnp.dtype(x.dtype).itemsize
    feat_isz = jnp.dtype(feature_store_dtype).itemsize
    per_img_io = Cin * HW * in_isz + 4 * Cout * HW * feat_isz + 8 * HW * 4
    per_img_vmem = 2 * per_img_io + 4 * Cout * HW * 4        # + f32 matmul result
    weights_vmem = 2 * (4 * Cout * Cin * jnp.dtype(compute_dtype).itemsize
                        + (4 * Cout + Cout + 1) * 4)
    bn_vmem = max(1, (vmem_budget - weights_vmem) // per_img_vmem)
    bn_amort = max(1, -(-target_step_bytes // per_img_io))   # ceil
    bn_steps = max(1, N // 4)
    bn = int(max(1, min(bn_vmem, bn_amort, bn_steps, N, max_images_per_step)))
    grid = (pl.cdiv(N, bn),)          # ragged last block: OOB reads unused, OOB writes dropped
    unroll = True if bn <= 8 else 8

    flops = 2 * N * HW * Cin * (4 * Cout) + 2 * N * HW * 4 * Cout
    bytes_accessed = int(N * per_img_io + weights_vmem // 2)

    kernel = _make_predictor_kernel(bn, Cout, unroll)

    yt, lt = pl.pallas_call(
        kernel,
        out_shape=(
            jax.ShapeDtypeStruct((N, 4 * Cout, HW), feature_store_dtype),
            jax.ShapeDtypeStruct((N, 8, HW), jnp.float32),
        ),
        grid_spec=pltpu.PrefetchScalarGridSpec(
            num_scalar_prefetch=0,
            grid=grid,
            in_specs=[
                pl.BlockSpec((bn, Cin, HW), lambda i: (i, 0, 0)),      # x, native layout
                pl.BlockSpec((4 * Cout, Cin), lambda i: (0, 0)),       # packed deconv W
                pl.BlockSpec((4 * Cout, 1), lambda i: (0, 0)),         # packed deconv b
                pl.BlockSpec((Cout, 1), lambda i: (0, 0)),             # 1x1 logits W
                pl.BlockSpec((1, 1), lambda i: (0, 0)),                # 1x1 logits b
            ],
            out_specs=(
                pl.BlockSpec((bn, 4 * Cout, HW), lambda i: (i, 0, 0)),
                pl.BlockSpec((bn, 8, HW), lambda i: (i, 0, 0)),
            ),
        ),
        compiler_params=pltpu.CompilerParams(
            dimension_semantics=("parallel",),
            vmem_limit_bytes=int(min(vmem_cap - vmem_cap // 8,
                                     vmem_budget + weights_vmem + (8 << 20))),
        ),
        cost_estimate=pl.CostEstimate(flops=flops, transcendentals=0,
                                      bytes_accessed=bytes_accessed),
    )(x3, WpackT, bpack, wl, bl)

    # ---- single (i,di)/(j,dj) interleave back to NCHW (reads bf16).
    # NOTE: consumers accepting the packed (N, 4*Cout, H*W) layout can skip it.
    feat = (yt.reshape(N, 2, 2, Cout, H, W)
              .transpose(0, 3, 4, 1, 5, 2)              # (n, co, i, di, j, dj)
              .reshape(N, Cout, 2 * H, 2 * W)
              .astype(jnp.float32))
    logits = (lt[:, :4, :].reshape(N, 2, 2, H, W)
                .transpose(0, 3, 1, 4, 2)               # (n, i, di, j, dj)
                .reshape(N, 2 * H, 2 * W)[:, None, :, :])
    return feat, logits


if __name__ == "__main__":
    # cfg-equivalent small shapes: dim_reduced = 8, USE_FPN with default
    # MIX_OPTION -> num_inputs = dim_reduced = 8, num_classes = 1.
    N, Cin, H, W = 2, 8, 16, 16
    Cout = 8
    key = jax.random.PRNGKey(0)
    k1, k2 = jax.random.split(key, 2)

    # Deterministic "kaiming_normal_(mode=fan_out, relu)"-style init, zero biases.
    w_deconv = (jax.random.normal(k1, (Cin, Cout, 2, 2), jnp.float32)
                * jnp.sqrt(2.0 / (Cout * 2 * 2)))
    b_deconv = jnp.zeros((Cout,), jnp.float32)
    w_logit = (jax.random.normal(k2, (1, Cout, 1, 1), jnp.float32)
               * jnp.sqrt(2.0 / 1.0))
    b_logit = jnp.zeros((1,), jnp.float32)

    x = jax.random.normal(jax.random.PRNGKey(42), (N, Cin, H, W), jnp.float32)

    feat, logits = seq_maskrcnn_c4_predictor(x, w_deconv, b_deconv, w_logit, b_logit)
    feat = jax.block_until_ready(feat)
    logits = jax.block_until_ready(logits)

    # Pure-JAX reference.  The kernel rounds x / w_deconv to bf16 for the MXU
    # (f32 accumulation) and stores the mask feature in bf16; the logits are
    # computed from the f32 accumulator.  Mirror that in the reference.
    xb = x.astype(jnp.bfloat16).astype(jnp.float32)
    wb = w_deconv.astype(jnp.bfloat16).astype(jnp.float32)
    y_ref = jnp.einsum("ncij,cokl->noikjl", xb, wb,
                       precision=lax.Precision.HIGHEST).reshape(N, Cout, 2 * H, 2 * W)
    y_ref = jnp.maximum(y_ref + b_deconv[None, :, None, None], 0.0)
    feat_ref = y_ref.astype(jnp.bfloat16).astype(jnp.float32)
    logit_ref = (jnp.einsum("nchw,oc->nohw", y_ref, w_logit.reshape(1, Cout),
                            precision=lax.Precision.HIGHEST)
                 + b_logit[None, :, None, None])

    assert feat.shape == (N, Cout, 2 * H, 2 * W)
    assert logits.shape == (N, 1, 2 * H, 2 * W)
    assert jnp.allclose(feat, feat_ref, atol=2e-2, rtol=2e-2)
    assert jnp.allclose(logits, logit_ref, atol=2e-2, rtol=2e-2)
    print("KERNEL_OK")
</pallas_src>

<mosaic_0001>
module attributes {stable_mosaic.version = 11 : i64} {
  func.func @kernel(%arg0: i32, %arg1: memref<1x8x256xf32, #tpu.memory_space<vmem>>, %arg2: memref<32x8xbf16, #tpu.memory_space<vmem>>, %arg3: memref<32x1xf32, #tpu.memory_space<vmem>>, %arg4: memref<8x1xf32, #tpu.memory_space<vmem>>, %arg5: memref<1x1xf32, #tpu.memory_space<vmem>>, %arg6: memref<1x32x256xbf16, #tpu.memory_space<vmem>>, %arg7: memref<1x8x256xf32, #tpu.memory_space<vmem>>) attributes {dimension_semantics = [#tpu.dimension_semantics<parallel>], iteration_bounds = array<i64: 2>, scalar_prefetch = 0 : i64, scratch_operands = 0 : i64, tpu.core_type = #tpu.core_type<tc>, window_params = [{transform_indices = @transform_0, window_bounds = array<i64: 1, 8, 256>}, {pipeline_mode = #tpu.pipeline_mode<synchronous>, transform_indices = @transform_1, window_bounds = array<i64: 32, 8>}, {pipeline_mode = #tpu.pipeline_mode<synchronous>, transform_indices = @transform_2, window_bounds = array<i64: 32, 1>}, {pipeline_mode = #tpu.pipeline_mode<synchronous>, transform_indices = @transform_3, window_bounds = array<i64: 8, 1>}, {pipeline_mode = #tpu.pipeline_mode<synchronous>, transform_indices = @transform_4, window_bounds = array<i64: 1, 1>}, {transform_indices = @transform_5, window_bounds = array<i64: 1, 32, 256>}, {transform_indices = @transform_6, window_bounds = array<i64: 1, 8, 256>}]} {
    %c0 = arith.constant 0 : index
    %c0_0 = arith.constant 0 : index
    %0 = vector.load %arg2[%c0, %c0_0] : memref<32x8xbf16, #tpu.memory_space<vmem>>, vector<32x8xbf16>
    %c0_1 = arith.constant 0 : index
    %c0_2 = arith.constant 0 : index
    %1 = vector.load %arg3[%c0_1, %c0_2] : memref<32x1xf32, #tpu.memory_space<vmem>>, vector<32x1xf32>
    %c0_3 = arith.constant 0 : index
    %c0_4 = arith.constant 0 : index
    %2 = vector.load %arg4[%c0_3, %c0_4] : memref<8x1xf32, #tpu.memory_space<vmem>>, vector<8x1xf32>
    %c0_5 = arith.constant 0 : index
    %c0_6 = arith.constant 0 : index
    %3 = vector.load %arg5[%c0_5, %c0_6] : memref<1x1xf32, #tpu.memory_space<vmem>>, vector<1x1xf32>
    %c0_i32 = arith.constant 0 : i32
    %4 = arith.index_cast %c0_i32 : i32 to index
    %c0_7 = arith.constant 0 : index
    %c0_8 = arith.constant 0 : index
    %5 = vector.load %arg1[%4, %c0_7, %c0_8] : memref<1x8x256xf32, #tpu.memory_space<vmem>>, vector<1x8x256xf32>
    %6 = vector.shape_cast %5 : vector<1x8x256xf32> to vector<8x256xf32>
    %7 = arith.truncf %6 : vector<8x256xf32> to vector<8x256xbf16>
    %cst = arith.constant dense<0.000000e+00> : vector<32x256xf32>
    %8 = tpu.matmul %0, %7, %cst {dimension_numbers = #tpu.dot_dimension_numbers<[1], [0], [0], [1], [0, 0, 1, 1], [], []>} : vector<32x8xbf16>, vector<8x256xbf16>, vector<32x256xf32> -> vector<32x256xf32>
    %9 = vector.broadcast %1 : vector<32x1xf32> to vector<32x256xf32>
    %10 = arith.addf %8, %9 : vector<32x256xf32>
    %cst_9 = arith.constant 0.000000e+00 : f32
    %11 = vector.broadcast %cst_9 : f32 to vector<32x256xf32>
    %12 = arith.maximumf %10, %11 : vector<32x256xf32>
    %13 = arith.truncf %12 : vector<32x256xf32> to vector<32x256xbf16>
    %14 = arith.index_cast %c0_i32 : i32 to index
    %c0_10 = arith.constant 0 : index
    %c0_11 = arith.constant 0 : index
    %15 = vector.load %arg6[%14, %c0_10, %c0_11] : memref<1x32x256xbf16, #tpu.memory_space<vmem>>, vector<1x32x256xbf16>
    %16 = vector.shape_cast %15 : vector<1x32x256xbf16> to vector<32x256xbf16>
    %17 = vector.shape_cast %13 : vector<32x256xbf16> to vector<1x32x256xbf16>
    tpu.vector_store %arg6[%14, %c0_10, %c0_11], %17 {strides = array<i32>} : memref<1x32x256xbf16, #tpu.memory_space<vmem>>, vector<1x32x256xbf16>,
    %18 = vector.shape_cast %12 : vector<32x256xf32> to vector<4x8x256xf32>
    %19 = vector.shape_cast %2 : vector<8x1xf32> to vector<1x8x1xf32>
    %20 = vector.broadcast %19 : vector<1x8x1xf32> to vector<4x8x256xf32>
    %21 = arith.mulf %18, %20 : vector<4x8x256xf32>
    %cst_12 = arith.constant dense<0.000000e+00> : vector<4x256xf32>
    %22 = vector.multi_reduction <add>, %21, %cst_12 [1] : vector<4x8x256xf32> to vector<4x256xf32>
    %23 = vector.broadcast %3 : vector<1x1xf32> to vector<4x256xf32>
    %24 = arith.addf %22, %23 : vector<4x256xf32>
    %cst_13 = arith.constant 0.000000e+00 : f32
    %25 = vector.broadcast %cst_13 : f32 to vector<4x256xf32>
    %26 = tpu.concatenate %24, %25 in 0 : vector<4x256xf32>, vector<4x256xf32> -> vector<8x256xf32>
    %27 = arith.index_cast %c0_i32 : i32 to index
    %c0_14 = arith.constant 0 : index
    %c0_15 = arith.constant 0 : index
    %28 = vector.load %arg7[%27, %c0_14, %c0_15] : memref<1x8x256xf32, #tpu.memory_space<vmem>>, vector<1x8x256xf32>
    %29 = vector.shape_cast %28 : vector<1x8x256xf32> to vector<8x256xf32>
    %30 = vector.shape_cast %26 : vector<8x256xf32> to vector<1x8x256xf32>
    tpu.vector_store %arg7[%27, %c0_14, %c0_15], %30 {strides = array<i32>} : memref<1x8x256xf32, #tpu.memory_space<vmem>>, vector<1x8x256xf32>,
    %c1_i32 = arith.constant 1 : i32
    return
  }
  func.func @transform_0(%arg0: i32) -> (i32, i32, i32) {
    %c0_i32 = arith.constant 0 : i32
    %c0_i32_0 = arith.constant 0 : i32
    %c0_i32_1 = arith.constant 0 : i32
    return %arg0, %c0_i32, %c0_i32_0 : i32, i32, i32
  }
  func.func @transform_1(%arg0: i32) -> (i32, i32) {
    %c0_i32 = arith.constant 0 : i32
    %c0_i32_0 = arith.constant 0 : i32
    %c0_i32_1 = arith.constant 0 : i32
    return %c0_i32, %c0_i32_0 : i32, i32
  }
  func.func @transform_2(%arg0: i32) -> (i32, i32) {
    %c0_i32 = arith.constant 0 : i32
    %c0_i32_0 = arith.constant 0 : i32
    %c0_i32_1 = arith.constant 0 : i32
    return %c0_i32, %c0_i32_0 : i32, i32
  }
  func.func @transform_3(%arg0: i32) -> (i32, i32) {
    %c0_i32 = arith.constant 0 : i32
    %c0_i32_0 = arith.constant 0 : i32
    %c0_i32_1 = arith.constant 0 : i32
    return %c0_i32, %c0_i32_0 : i32, i32
  }
  func.func @transform_4(%arg0: i32) -> (i32, i32) {
    %c0_i32 = arith.constant 0 : i32
    %c0_i32_0 = arith.constant 0 : i32
    %c0_i32_1 = arith.constant 0 : i32
    return %c0_i32, %c0_i32_0 : i32, i32
  }
  func.func @transform_5(%arg0: i32) -> (i32, i32, i32) {
    %c0_i32 = arith.constant 0 : i32
    %c0_i32_0 = arith.constant 0 : i32
    %c0_i32_1 = arith.constant 0 : i32
    return %arg0, %c0_i32, %c0_i32_0 : i32, i32, i32
  }
  func.func @transform_6(%arg0: i32) -> (i32, i32, i32) {
    %c0_i32 = arith.constant 0 : i32
    %c0_i32_0 = arith.constant 0 : i32
    %c0_i32_1 = arith.constant 0 : i32
    return %arg0, %c0_i32, %c0_i32_0 : i32, i32, i32
  }
}

</mosaic_0001>

<llo_original>
// kernel: tpu_custom_call.1
$region0: #{tpu_custom_call.1}
  #allocation0 [shape = 'u32[]', space=smem, size = 0x4, offset = 0x4, fixed_abs, tag = 'smem constant byte address 0x4 - core index']
  #allocation1 [shape = 'u32[144,128]{1,0:T(1,128)}', space=vmem, size = 0x12000, scoped, tag = 'internal scratch']
  #allocation2 [shape = 'f32[1,1]{1,0:T(1,128)S(1)}', space=vmem, size = 0x200, scoped, tag = 'scoped memory for tpu_custom_call.1']
  %s0 = inlined_call_operand.vmem [shape: f32[2,8,256], index: 0, kind: input, shape index: {}]
  %s1 = inlined_call_operand.vmem [shape: bf16[32,8], index: 1, kind: input, shape index: {}]
  %s2 = inlined_call_operand.vmem [shape: f32[32,1], index: 2, kind: input, shape index: {}]
  %s3 = inlined_call_operand.vmem [shape: f32[8,1], index: 3, kind: input, shape index: {}]
  %s4 = inlined_call_operand.<no memory space> [shape: f32[1,1], index: 4, kind: input, shape index: {}]
  %s5 = inlined_call_operand.hbm [shape: bf16[2,32,256], index: 5, kind: output, shape index: {0}]
  %s6 = inlined_call_operand.hbm [shape: f32[2,8,256], index: 6, kind: output, shape index: {1}]
  %7 = xla_tuple %s5, %s6
  %s8 = sld [smem:[#allocation0]]
  $region61: #{tpu_custom_call.1} parent=0
    _
  %s10 = ssub.s32 1, %s8
  %s11 = scalar_select 0, %s10, %s8
  %v12 = vstv %s4
  %13 = vst [vmem:[#allocation2] sm:$0x1] %v12
  $region1: #{tpu_custom_call.1} parent=0
    #allocation3 [shape = 'u8[32768]{0}', space=vmem, size = 0x8000, scoped, tag = 'output window, operand 0']
    #allocation4 [shape = 's32[2]{0}', space=sflag, size = 0x8, scoped, tag = 'scoped memory for tpu_custom_call.1']
    #allocation5 [shape = 'u8[16384]{0}', space=vmem, size = 0x4000, scoped, tag = 'output window, operand 1']
    #allocation6 [shape = 's32[2]{0}', space=sflag, size = 0x8, scoped, tag = 'scoped memory for tpu_custom_call.1']
    %14 = vsyncpa [#allocation4], 0
    %s15 = scalar_lea.sflag [#allocation4], 1
    %16 = vsyncpa %s15, 0
    %17 = vsyncpa [#allocation6], 0
    %s18 = scalar_lea.sflag [#allocation6], 1
    %19 = vsyncpa %s18, 0
    loop: start=0, step=1, limit=4
    $region2: #{tpu_custom_call.1} parent=1 // loop_pre_header
      _
    $region3: #{tpu_custom_call.1} parent=1 // loop_header
      %s21 = sphi 0, %s25
      %p22 = scmp.ge.s32.totalorder %s21, 4
      %s31 = sphi 0, %s33
      %s34 = sphi 0, %s31
      %s35 = sphi 0, %s34
      %s51 = sphi 0, %s35
      %s55 = sphi 0, %s55
      %s57 = sphi 0, %s55
      %s58 = sphi 0, %s57
      %s72 = sphi 0, %s58
      %s76 = sphi 0, %s76
      %s78 = sphi 0, %s76
      %s79 = sphi 0, %s78
      %s93 = sphi 0, %s79
      %s97 = sphi 0, %s97
      %s99 = sphi 0, %s97
      %s100 = sphi 0, %s99
      %s114 = sphi 0, %s100
      %s118 = sphi 0, %s118
      %s120 = sphi 0, %s118
      %s121 = sphi 0, %s120
      %s135 = sphi 0, %s121
      %s141 = sphi 0, %s143
      %s144 = sphi 0, %s141
      %s145 = sphi 0, %s144
      %s161 = sphi 0, %s145
      %s167 = sphi 0, %s169
      %s170 = sphi 0, %s167
      %s171 = sphi 0, %s170
      %s187 = sphi 0, %s171
    $region4: #{tpu_custom_call.1} parent=1 // loop_header_branch
      %24 = sbr.rel (%p22) target = $region8
    $region5: #{tpu_custom_call.1} parent=1 // loop_body
      %s26 = ssub.s32 %s21, 1
      %s27 = ssub.s32 %s21, 2
      %s28 = sadd.s32 %s21, 1
      %s29 = ssub.s32 %s21, %s28
      %p30 = scmp.eq.s32.totalorder %s29, 0
      %s32 = sadd.s32 %s31, 1
      %s33 = scalar_select %p30, %s31, %s32
      %p36 = pneg %p30
      %p37 = scmp.eq.s32.totalorder %s21, 1
      %p38 = por %p36, %p37
      %p39 = scmp.ne.s32.totalorder %s31, %s34
      %p40 = scmp.eq.s32.totalorder %s21, 0
      %p41 = por %p39, %p40
      %p42 = scmp.ne.s32.totalorder %s31, %s34
      %p43 = scmp.eq.s32.totalorder %s26, 1
      %p44 = por %p42, %p43
      %p45 = scmp.ne.s32.totalorder %s34, %s35
      %p46 = scmp.eq.s32.totalorder %s26, 0
      %p47 = por %p45, %p46
      %p48 = scmp.ne.s32.totalorder %s34, %s35
      %p49 = scmp.eq.s32.totalorder %s27, 1
      %p50 = por %p48, %p49
      %p52 = scmp.ne.s32.totalorder %s35, %s51
      %p53 = scmp.eq.s32.totalorder %s27, 0
      %p54 = por %p52, %p53
      %s56 = sadd.s32 %s55, 1
      %p59 = scmp.eq.s32.totalorder %s21, 1
      %p60 = scmp.ne.s32.totalorder %s55, %s57
      %p61 = scmp.eq.s32.totalorder %s21, 0
      %p62 = por %p60, %p61
      %p63 = scmp.ne.s32.totalorder %s55, %s57
      %p64 = scmp.eq.s32.totalorder %s26, 1
      %p65 = por %p63, %p64
      %p66 = scmp.ne.s32.totalorder %s57, %s58
      %p67 = scmp.eq.s32.totalorder %s26, 0
      %p68 = por %p66, %p67
      %p69 = scmp.ne.s32.totalorder %s57, %s58
      %p70 = scmp.eq.s32.totalorder %s27, 1
      %p71 = por %p69, %p70
      %p73 = scmp.ne.s32.totalorder %s58, %s72
      %p74 = scmp.eq.s32.totalorder %s27, 0
      %p75 = por %p73, %p74
      %s77 = sadd.s32 %s76, 1
      %p80 = scmp.eq.s32.totalorder %s21, 1
      %p81 = scmp.ne.s32.totalorder %s76, %s78
      %p82 = scmp.eq.s32.totalorder %s21, 0
      %p83 = por %p81, %p82
      %p84 = scmp.ne.s32.totalorder %s76, %s78
      %p85 = scmp.eq.s32.totalorder %s26, 1
      %p86 = por %p84, %p85
      %p87 = scmp.ne.s32.totalorder %s78, %s79
      %p88 = scmp.eq.s32.totalorder %s26, 0
      %p89 = por %p87, %p88
      %p90 = scmp.ne.s32.totalorder %s78, %s79
      %p91 = scmp.eq.s32.totalorder %s27, 1
      %p92 = por %p90, %p91
      %p94 = scmp.ne.s32.totalorder %s79, %s93
      %p95 = scmp.eq.s32.totalorder %s27, 0
      %p96 = por %p94, %p95
      %s98 = sadd.s32 %s97, 1
      %p101 = scmp.eq.s32.totalorder %s21, 1
      %p102 = scmp.ne.s32.totalorder %s97, %s99
      %p103 = scmp.eq.s32.totalorder %s21, 0
      %p104 = por %p102, %p103
      %p105 = scmp.ne.s32.totalorder %s97, %s99
      %p106 = scmp.eq.s32.totalorder %s26, 1
      %p107 = por %p105, %p106
      %p108 = scmp.ne.s32.totalorder %s99, %s100
      %p109 = scmp.eq.s32.totalorder %s26, 0
      %p110 = por %p108, %p109
      %p111 = scmp.ne.s32.totalorder %s99, %s100
      %p112 = scmp.eq.s32.totalorder %s27, 1
      %p113 = por %p111, %p112
      %p115 = scmp.ne.s32.totalorder %s100, %s114
      %p116 = scmp.eq.s32.totalorder %s27, 0
      %p117 = por %p115, %p116
      %s119 = sadd.s32 %s118, 1
      %p122 = scmp.eq.s32.totalorder %s21, 1
      %p123 = scmp.ne.s32.totalorder %s118, %s120
      %p124 = scmp.eq.s32.totalorder %s21, 0
      %p125 = por %p123, %p124
      %p126 = scmp.ne.s32.totalorder %s118, %s120
      %p127 = scmp.eq.s32.totalorder %s26, 1
      %p128 = por %p126, %p127
      %p129 = scmp.ne.s32.totalorder %s120, %s121
      %p130 = scmp.eq.s32.totalorder %s26, 0
      %p131 = por %p129, %p130
      %p132 = scmp.ne.s32.totalorder %s120, %s121
      %p133 = scmp.eq.s32.totalorder %s27, 1
      %p134 = por %p132, %p133
      %p136 = scmp.ne.s32.totalorder %s121, %s135
      %p137 = scmp.eq.s32.totalorder %s27, 0
      %p138 = por %p136, %p137
      %s139 = ssub.s32 %s21, %s28
      %p140 = scmp.eq.s32.totalorder %s139, 0
      %s142 = sadd.s32 %s141, 1
      %s143 = scalar_select %p140, %s141, %s142
      %p146 = pneg %p140
      %p147 = scmp.eq.s32.totalorder %s21, 1
      %p148 = por %p146, %p147
      %p149 = scmp.ne.s32.totalorder %s141, %s144
      %p150 = scmp.eq.s32.totalorder %s21, 0
      %p151 = por %p149, %p150
      %p152 = scmp.ne.s32.totalorder %s141, %s144
      %p153 = scmp.eq.s32.totalorder %s26, 1
      %p154 = por %p152, %p153
      %p155 = scmp.ne.s32.totalorder %s144, %s145
      %p156 = scmp.eq.s32.totalorder %s26, 0
      %p157 = por %p155, %p156
      %p158 = scmp.ne.s32.totalorder %s144, %s145
      %p159 = scmp.eq.s32.totalorder %s27, 1
      %p160 = por %p158, %p159
      %p162 = scmp.ne.s32.totalorder %s145, %s161
      %p163 = scmp.eq.s32.totalorder %s27, 0
      %p164 = por %p162, %p163
      %s165 = ssub.s32 %s21, %s28
      %p166 = scmp.eq.s32.totalorder %s165, 0
      %s168 = sadd.s32 %s167, 1
      %s169 = scalar_select %p166, %s167, %s168
      %p172 = pneg %p166
      %p173 = scmp.eq.s32.totalorder %s21, 1
      %p174 = por %p172, %p173
      %p175 = scmp.ne.s32.totalorder %s167, %s170
      %p176 = scmp.eq.s32.totalorder %s21, 0
      %p177 = por %p175, %p176
      %p178 = scmp.ne.s32.totalorder %s167, %s170
      %p179 = scmp.eq.s32.totalorder %s26, 1
      %p180 = por %p178, %p179
      %p181 = scmp.ne.s32.totalorder %s170, %s171
      %p182 = scmp.eq.s32.totalorder %s26, 0
      %p183 = por %p181, %p182
      %p184 = scmp.ne.s32.totalorder %s170, %s171
      %p185 = scmp.eq.s32.totalorder %s27, 1
      %p186 = por %p184, %p185
      %p188 = scmp.ne.s32.totalorder %s171, %s187
      %p189 = scmp.eq.s32.totalorder %s27, 0
      %p190 = por %p188, %p189
      %p191 = scmp.le.s32.totalorder 1, %s21
      %p192 = scmp.lt.s32.totalorder %s21, 3
      %p193 = pnand %p191, %p192
      %p194 = pneg %p193
      // Predicated region
      $region9: #{tpu_custom_call.1} parent=5 // pred_check
        _
      $region10: #{tpu_custom_call.1} parent=5 // pred_check_branch
        %196 = sbr.rel (%p193) target = $region12
      $region11: #{tpu_custom_call.1} parent=5 // pred_region
        %s197 = ssub.s32 %s21, 1
        // Predicated region
        $region13: #{tpu_custom_call.1} parent=11 // pred_check
          %p198 = pneg %p68
        $region14: #{tpu_custom_call.1} parent=11 // pred_check_branch
          %200 = sbr.rel (%p198) target = $region16
        $region15: #{tpu_custom_call.1} parent=11 // pred_region
          _
        $region16: #{tpu_custom_call.1} parent=11 // pred_fallthru
          _
        // Predicated region
        $region17: #{tpu_custom_call.1} parent=11 // pred_check
          %p201 = pneg %p89
        $region18: #{tpu_custom_call.1} parent=11 // pred_check_branch
          %203 = sbr.rel (%p201) target = $region20
        $region19: #{tpu_custom_call.1} parent=11 // pred_region
          _
        $region20: #{tpu_custom_call.1} parent=11 // pred_fallthru
          _
        // Predicated region
        $region21: #{tpu_custom_call.1} parent=11 // pred_check
          %p204 = pneg %p110
        $region22: #{tpu_custom_call.1} parent=11 // pred_check_branch
          %206 = sbr.rel (%p204) target = $region24
        $region23: #{tpu_custom_call.1} parent=11 // pred_region
          _
        $region24: #{tpu_custom_call.1} parent=11 // pred_fallthru
          _
        // Predicated region
        $region25: #{tpu_custom_call.1} parent=11 // pred_check
          %p207 = pneg %p131
        $region26: #{tpu_custom_call.1} parent=11 // pred_check_branch
          %209 = sbr.rel (%p207) target = $region28
        $region27: #{tpu_custom_call.1} parent=11 // pred_region
          _
        $region28: #{tpu_custom_call.1} parent=11 // pred_fallthru
          _
      $region12: #{tpu_custom_call.1} parent=5 // pred_fallthru
        _
      %p210 = scmp.lt.s32.totalorder %s21, 2
      // Predicated region
      $region29: #{tpu_custom_call.1} parent=5 // pred_check
        %p211 = pneg %p210
      $region30: #{tpu_custom_call.1} parent=5 // pred_check_branch
        %213 = sbr.rel (%p211) target = $region32
      $region31: #{tpu_custom_call.1} parent=5 // pred_region
        // Predicated region
        $region33: #{tpu_custom_call.1} parent=31 // pred_check
          %p214 = pneg %p41
        $region34: #{tpu_custom_call.1} parent=31 // pred_check_branch
          %216 = sbr.rel (%p214) target = $region36
        $region35: #{tpu_custom_call.1} parent=31 // pred_region
          %p217 = scmp.lt.s32.totalorder %s21, 1
          %s218 = scalar_select %p217, %s21, 1
          %s219 = smul.addr %s218, 2
          %s220 = smul.addr %s219, 8
          %s221 = scalar_lea.vmem %s0, %s220
        $region36: #{tpu_custom_call.1} parent=31 // pred_fallthru
          _
      $region32: #{tpu_custom_call.1} parent=5 // pred_fallthru
        _
      %p222 = scmp.le.s32.totalorder 1, %s21
      %p223 = scmp.lt.s32.totalorder %s21, 3
      %p224 = pnand %p222, %p223
      %p225 = pneg %p224
      // Predicated region
      $region37: #{tpu_custom_call.1} parent=5 // pred_check
        _
      $region38: #{tpu_custom_call.1} parent=5 // pred_check_branch
        %227 = sbr.rel (%p224) target = $region40
      $region39: #{tpu_custom_call.1} parent=5 // pred_region
        %s228 = ssub.s32 %s21, 1
        %p229 = scmp.lt.s32.totalorder %s26, 1
        %s230 = scalar_select %p229, %s26, 1
        %s231 = smul.addr %s230, 2
        %s232 = smul.addr %s231, 8
        %s233 = scalar_lea.vmem %s0, %s232
        %p234 = pneg %p47
        %p235 = pneg %p44
        %p236 = pneg %p68
        %p237 = pneg %p65
        %p238 = pneg %p89
        %p239 = pneg %p86
        %p240 = pneg %p110
        %p241 = pneg %p107
        %p242 = pneg %p131
        %p243 = pneg %p128
        %p244 = pneg %p157
        %p245 = pneg %p154
        %s246 = sand.u32 %s144, 1
        %s247 = scalar_lea.sflag [#allocation4], %s246
        %s248 = sand.u32 %s144, 1
        %s249 = smul.addr %s248, 32
        %s250 = scalar_lea.vmem [#allocation3], %s249
        %p251 = pneg %p183
        %p252 = pneg %p180
        %s253 = sand.u32 %s170, 1
        %s254 = scalar_lea.sflag [#allocation6], %s253
        %s255 = sand.u32 %s170, 1
        %s256 = smul.addr %s255, 16
        %s257 = scalar_lea.vmem [#allocation5], %s256
        %p258 = scmp.lt.s32.totalorder %s26, 1
        %s259 = scalar_select %p258, %s26, 1
        %s260 = smul.addr %s259, 2
        %s261 = smul.addr %s260, 8
        %s262 = scalar_lea.vmem %s0, %s261
        %v264 = vld [vmem:[%s1] sm:$0xf]
        %v265 = vld [vmem:[%s1 + $0x4] sm:$0xf]
        %v266 = vld [vmem:[%s1 + $0x8] sm:$0xf]
        %v267 = vld [vmem:[%s1 + $0xc] sm:$0xf]
        %v268 = vld [vmem:[%s2] sm:$0xff]
        %v269 = vld [vmem:[%s2 + $0x8] sm:$0xff]
        %v270 = vld [vmem:[%s2 + $0x10] sm:$0xff]
        %v271 = vld [vmem:[%s2 + $0x18] sm:$0xff]
        %v272 = vld [vmem:[%s3] sm:$0xff]
        %v273 = vld [vmem:[#allocation2] sm:$0x1]
        %v274 = vld [vmem:[%s262] sm:$0xff]
        %v275 = vld [vmem:[%s262 + $0x8] sm:$0xff]
        %v276 = vpack.c.bf16 %v274, %v274
        %v277 = vpack.c.bf16 %v275, %v275
        %279 = vset.pattern.permute.xlu0 0
        %280 = vperm.xlu0 %279, %v268
        %v281 = vpop.permute.xlu0 %280
        %284 = vset.pattern.permute.xlu0 0
        %285 = vperm.xlu0 %284, %v269
        %v286 = vpop.permute.xlu0 %285
        %289 = vset.pattern.permute.xlu0 0
        %290 = vperm.xlu0 %289, %v270
        %v291 = vpop.permute.xlu0 %290
        %294 = vset.pattern.permute.xlu0 0
        %295 = vperm.xlu0 %294, %v271
        %v296 = vpop.permute.xlu0 %295
        %v302 = vunpack.c.l.b16 %v264
        %v303 = vunpack.c.l.b16 %v265
        %v304 = vunpack.c.l.b16 %v266
        %v305 = vunpack.c.l.b16 %v267
        %v306 = vpack.c.b16 %v303, %v302
        %v307 = vpack.c.b16 %v305, %v304
        %vm308 = vcmask 64512
        %v310 = vsel %vm308, %v306, 0
        %v313 = vsel %vm308, %v307, 0
        %vm315 = vcmask 1043456
        %v317 = vsel %vm315, %v276, 0
        %v320 = vsel %vm315, %v277, 0
        %322 = vmatprep.subr.bf16.mxu0 %v320
        %323 = vmatpush1.bf16.msra.mxu0 %v317
        %324 = vmatprep.subr.bf16.mxu0 0
        %325 = vmatpush1.bf16.msra.mxu0 0
        %326 = vmatprep.subr.bf16.mxu0 0
        %327 = vmatpush1.bf16.msra.mxu0 0
        %328 = vmatprep.subr.bf16.mxu0 0
        %329 = vmatpush1.bf16.msra.mxu0 0
        %330 = vmatprep.subr.bf16.mxu0 0
        %331 = vmatpush1.bf16.msra.mxu0 0
        %332 = vmatprep.subr.bf16.mxu0 0
        %333 = vmatpush1.bf16.msra.mxu0 0
        %334 = vmatprep.subr.bf16.mxu0 0
        %335 = vmatpush1.bf16.msra.mxu0 0
        %336 = vmatprep.subr.bf16.mxu0 0
        %337 = vmatpush1.bf16.msra.mxu0 0
        %338 = vmatprep.subr.bf16.mxu0 0
        %339 = vmatpush1.bf16.msra.mxu0 0
        %340 = vmatprep.subr.bf16.mxu0 0
        %341 = vmatpush1.bf16.msra.mxu0 0
        %342 = vmatprep.subr.bf16.mxu0 0
        %343 = vmatpush1.bf16.msra.mxu0 0
        %344 = vmatprep.subr.bf16.mxu0 0
        %345 = vmatpush1.bf16.msra.mxu0 0
        %346 = vmatprep.subr.bf16.mxu0 0
        %347 = vmatpush1.bf16.msra.mxu0 0
        %348 = vmatprep.subr.bf16.mxu0 0
        %349 = vmatpush1.bf16.msra.mxu0 0
        %350 = vmatprep.subr.bf16.mxu0 0
        %351 = vmatpush1.bf16.msra.mxu0 0
        %352 = vmatprep.subr.bf16.mxu0 0
        %353 = vmatpush1.bf16.msra.mxu0 0
        %354 = vmatprep.mubr.bf16.mxu0 0
        %355 = vmatmul.mubr.bf16.gmra.mrb[0].mxu0 %v310
        %v356 = vpop.f32.mrb[0].mxu0
        %v357 = vadd.f32 %v281, %v356
        %v358 = vpop.f32.mrb[0].mxu0
        %v359 = vadd.f32 %v281, %v358
        %v360 = vpop.f32.mrb[0].mxu0
        %v361 = vadd.f32 %v286, %v360
        %v362 = vpop.f32.mrb[0].mxu0
        %v363 = vadd.f32 %v286, %v362
        %364 = vmatprep.mubr.bf16.mxu0 0
        %365 = vmatmul.mubr.bf16.gmra.mrb[0].mxu0 %v313
        %v366 = vpop.f32.mrb[0].mxu0
        %v367 = vadd.f32 %v291, %v366
        %v368 = vpop.f32.mrb[0].mxu0
        %v369 = vadd.f32 %v291, %v368
        %v370 = vpop.f32.mrb[0].mxu0
        %v371 = vadd.f32 %v296, %v370
        %v372 = vpop.f32.mrb[0].mxu0
        %v373 = vadd.f32 %v296, %v372
        %374 = vdwg.mxu0
        %v375 = vmax.f32 %v357, 0.0
        %v376 = vmax.f32 %v359, 0.0
        %v377 = vmax.f32 %v361, 0.0
        %v378 = vmax.f32 %v363, 0.0
        %v379 = vmax.f32 %v367, 0.0
        %v380 = vmax.f32 %v369, 0.0
        %v381 = vmax.f32 %v371, 0.0
        %v382 = vmax.f32 %v373, 0.0
        %v383 = vpack.c.bf16 %v377, %v375
        %v384 = vpack.c.bf16 %v378, %v376
        %v385 = vpack.c.bf16 %v381, %v379
        %v386 = vpack.c.bf16 %v382, %v380
        %v391 = vunpack.c.l.b16 %v383
        %v392 = vunpack.c.l.b16 %v384
        %v393 = vunpack.c.h.b16 %v383
        %v394 = vunpack.c.h.b16 %v384
        %v395 = vunpack.c.l.b16 %v385
        %v396 = vunpack.c.l.b16 %v386
        %v397 = vunpack.c.h.b16 %v385
        %v398 = vunpack.c.h.b16 %v386
        %v399 = vpack.c.b16 %v392, %v391
        %v400 = vpack.c.b16 %v394, %v393
        %v401 = vpack.c.b16 %v396, %v395
        %v402 = vpack.c.b16 %v398, %v397
        %407 = vst [vmem:[%s250] sm:$0xff] %v399
        %408 = vst [vmem:[%s250 + $0x8] sm:$0xff] %v400
        %409 = vst [vmem:[%s250 + $0x10] sm:$0xff] %v401
        %410 = vst [vmem:[%s250 + $0x18] sm:$0xff] %v402
        %412 = vset.pattern.permute.xlu0 0
        %413 = vperm.xlu0 %412, %v272
        %v414 = vpop.permute.xlu0 %413
        %v416 = vmul.f32 %v375, %v414
        %v417 = vmul.f32 %v376, %v414
        %v418 = vmul.f32 %v377, %v414
        %v419 = vmul.f32 %v378, %v414
        %v420 = vmul.f32 %v379, %v414
        %v421 = vmul.f32 %v380, %v414
        %v422 = vmul.f32 %v381, %v414
        %v423 = vmul.f32 %v382, %v414
        %v424 = vrot.slane %v416, 4
        %v425 = vadd.f32 %v416, %v424
        %v426 = vrot.slane %v425, 2
        %v427 = vadd.f32 %v425, %v426
        %v428 = vrot.slane %v427, 1
        %v429 = vadd.f32 %v427, %v428
        %v430 = vrot.slane %v417, 4
        %v431 = vadd.f32 %v417, %v430
        %v432 = vrot.slane %v431, 2
        %v433 = vadd.f32 %v431, %v432
        %v434 = vrot.slane %v433, 1
        %v435 = vadd.f32 %v433, %v434
        %v436 = vrot.slane %v418, 4
        %v437 = vadd.f32 %v418, %v436
        %v438 = vrot.slane %v437, 2
        %v439 = vadd.f32 %v437, %v438
        %v440 = vrot.slane %v439, 1
        %v441 = vadd.f32 %v439, %v440
        %v442 = vrot.slane %v419, 4
        %v443 = vadd.f32 %v419, %v442
        %v444 = vrot.slane %v443, 2
        %v445 = vadd.f32 %v443, %v444
        %v446 = vrot.slane %v445, 1
        %v447 = vadd.f32 %v445, %v446
        %v448 = vrot.slane %v420, 4
        %v449 = vadd.f32 %v420, %v448
        %v450 = vrot.slane %v449, 2
        %v451 = vadd.f32 %v449, %v450
        %v452 = vrot.slane %v451, 1
        %v453 = vadd.f32 %v451, %v452
        %v454 = vrot.slane %v421, 4
        %v455 = vadd.f32 %v421, %v454
        %v456 = vrot.slane %v455, 2
        %v457 = vadd.f32 %v455, %v456
        %v458 = vrot.slane %v457, 1
        %v459 = vadd.f32 %v457, %v458
        %v460 = vrot.slane %v422, 4
        %v461 = vadd.f32 %v422, %v460
        %v462 = vrot.slane %v461, 2
        %v463 = vadd.f32 %v461, %v462
        %v464 = vrot.slane %v463, 1
        %v465 = vadd.f32 %v463, %v464
        %v466 = vrot.slane %v423, 4
        %v467 = vadd.f32 %v423, %v466
        %v468 = vrot.slane %v467, 2
        %v469 = vadd.f32 %v467, %v468
        %v470 = vrot.slane %v469, 1
        %v471 = vadd.f32 %v469, %v470
        %v473 = vlaneseq
        %v474 = vshrl.u32 %v473, 7
        %v475 = vsub.s32 0, %v474
        %v476 = vrot.slane %v273, %v475
        %477 = vset.pattern.permute.xlu0 0
        %478 = vperm.xlu0 %477, %v476
        %v479 = vpop.permute.xlu0 %478
        %v481 = vadd.f32 %v429, %v479
        %v482 = vadd.f32 %v435, %v479
        %v483 = vadd.f32 %v441, %v479
        %v484 = vadd.f32 %v447, %v479
        %v485 = vadd.f32 %v453, %v479
        %v486 = vadd.f32 %v459, %v479
        %v487 = vadd.f32 %v465, %v479
        %v488 = vadd.f32 %v471, %v479
        %vm497 = vcmask 1041409
        %v498 = vsel %vm497, %v483, %v481
        %vm499 = vcmask 1042434
        %v500 = vsel %vm499, %v485, %v498
        %vm501 = vcmask 1043459
        %v502 = vsel %vm501, %v487, %v500
        %v503 = vsel %vm497, %v484, %v482
        %v504 = vsel %vm499, %v486, %v503
        %v505 = vsel %vm501, %v488, %v504
        %v508 = vsel %vm315, %v502, 0.0
        %v509 = vsel %vm315, %v505, 0.0
        %510 = vst [vmem:[%s257] sm:$0xff] %v508
        %511 = vst [vmem:[%s257 + $0x8] sm:$0xff] %v509
        %s512 = sand.u32 %s144, 1
        %s513 = scalar_lea.sflag [#allocation4], %s512
        %s514 = sand.u32 %s144, 1
        %s515 = smul.addr %s514, 32
        %s516 = scalar_lea.vmem [#allocation3], %s515
        %s517 = sand.u32 %s170, 1
        %s518 = scalar_lea.sflag [#allocation6], %s517
        %s519 = sand.u32 %s170, 1
        %s520 = smul.addr %s519, 16
        %s521 = scalar_lea.vmem [#allocation5], %s520
        // Predicated region
        $region41: #{tpu_custom_call.1} parent=39 // pred_check
          %p522 = pneg %p154
        $region42: #{tpu_custom_call.1} parent=39 // pred_check_branch
          %524 = sbr.rel (%p522) target = $region44
        $region43: #{tpu_custom_call.1} parent=39 // pred_region
          %s526 = ssub.s32 512, 512
          %527 = vsyncadd %s513, %s526
          %s528 = smul.addr %s26, 8
          %s529 = smul.addr %s528, 64
          %s530 = scalar_lea.hbm %s5, %s529
          %s531 = sshll.u32 %s516, 4
          %s532 = int_to_ptr.vmem [resolvable:$true] %s531
          %537 = dma.vmem_to_hbm [thread:$0]  %s532, 512, %s530, %s513, 128, 128, 8
        $region44: #{tpu_custom_call.1} parent=39 // pred_fallthru
          _
        // Predicated region
        $region45: #{tpu_custom_call.1} parent=39 // pred_check
          %p538 = pneg %p180
        $region46: #{tpu_custom_call.1} parent=39 // pred_check_branch
          %540 = sbr.rel (%p538) target = $region48
        $region47: #{tpu_custom_call.1} parent=39 // pred_region
          %s542 = ssub.s32 256, 256
          %543 = vsyncadd %s518, %s542
          %s544 = smul.addr %s26, 2
          %s545 = smul.addr %s544, 128
          %s546 = scalar_lea.hbm %s6, %s545
          %s548 = sshll.u32 %s521, 4
          %s549 = int_to_ptr.vmem [resolvable:$true] %s548
          %551 = dma.vmem_to_hbm [thread:$0]  %s549, 256, %s546, %s518
        $region48: #{tpu_custom_call.1} parent=39 // pred_fallthru
          _
      $region40: #{tpu_custom_call.1} parent=5 // pred_fallthru
        _
      %p552 = scmp.le.s32.totalorder 2, %s21
      // Predicated region
      $region49: #{tpu_custom_call.1} parent=5 // pred_check
        %p553 = pneg %p552
      $region50: #{tpu_custom_call.1} parent=5 // pred_check_branch
        %555 = sbr.rel (%p553) target = $region52
      $region51: #{tpu_custom_call.1} parent=5 // pred_region
        %s556 = ssub.s32 %s21, 2
        // Predicated region
        $region53: #{tpu_custom_call.1} parent=51 // pred_check
          %p557 = pneg %p160
        $region54: #{tpu_custom_call.1} parent=51 // pred_check_branch
          %559 = sbr.rel (%p557) target = $region56
        $region55: #{tpu_custom_call.1} parent=51 // pred_region
          %s560 = sand.u32 %s145, 1
          %s561 = scalar_lea.sflag [#allocation4], %s560
          %s562 = sand.u32 %s145, 1
          %s563 = smul.addr %s562, 32
          %s564 = scalar_lea.vmem [#allocation3], %s563
          %565 = dma.done %s561, 512
        $region56: #{tpu_custom_call.1} parent=51 // pred_fallthru
          _
        // Predicated region
        $region57: #{tpu_custom_call.1} parent=51 // pred_check
          %p566 = pneg %p186
        $region58: #{tpu_custom_call.1} parent=51 // pred_check_branch
          %568 = sbr.rel (%p566) target = $region60
        $region59: #{tpu_custom_call.1} parent=51 // pred_region
          %s569 = sand.u32 %s171, 1
          %s570 = scalar_lea.sflag [#allocation6], %s569
          %s571 = sand.u32 %s171, 1
          %s572 = smul.addr %s571, 16
          %s573 = scalar_lea.vmem [#allocation5], %s572
          %574 = dma.done %s570, 256
        $region60: #{tpu_custom_call.1} parent=51 // pred_fallthru
          _
      $region52: #{tpu_custom_call.1} parent=5 // pred_fallthru
        _
    $region6: #{tpu_custom_call.1} parent=1 // loop_footer
      %s25 = sadd.s32 1, %s21
    $region7: #{tpu_custom_call.1} parent=1 // loop_footer_branch
      %20 = sbr.rel target = $region3
    $region8: #{tpu_custom_call.1} parent=1 // loop_exit
      _
    %575 = vsyncpa [#allocation4], 1
    %s576 = scalar_lea.sflag [#allocation4], 1
    %577 = vsyncpa %s576, 1
    %578 = vsyncpa [#allocation6], 1
    %s579 = scalar_lea.sflag [#allocation6], 1
    %580 = vsyncpa %s579, 1

</llo_original>
